<compile_context>
chip_gen: v7x
topology: tpu7x:2x2x1
jax: 0.10.0
libtpu: 0.0.40
codegen_flags: <defaults>
</compile_context>

<pallas_src>
import jax
import jax.numpy as jnp
from jax.experimental import pallas as pl
from jax.experimental.pallas import tpu as pltpu


def _bar_dist_kernel(scalars_ref, lower_ref, upper_ref, logw_ref,
                     logits_ref, y_ref, out_ref):
    # scalars_ref : SMEM (1,)   = [borders[0]]
    # lower_ref   : VMEM (1,B)  = borders[:-1]
    # upper_ref   : VMEM (1,B)  = borders[1:]
    # logw_ref    : VMEM (1,B)  = log(bucket_widths)
    # logits_ref  : VMEM (TN,B) native dtype (e.g. bf16)
    # y_ref       : VMEM (TN,1) native dtype
    # out_ref     : VMEM (TN,1) f32
    b0 = scalars_ref[0]

    logits = logits_ref[...].astype(jnp.float32)   # (TN, B)
    y = y_ref[...].astype(jnp.float32)             # (TN, 1)
    lower = lower_ref[...]                         # (1, B)
    upper = upper_ref[...]                         # (1, B)
    log_w = logw_ref[...]                          # (1, B)

    nan_mask = jnp.isnan(y)                        # (TN, 1)

    # Two-sided interval one-hot: bucket k iff borders[k] < y <= borders[k+1].
    # y == borders[0] override selects the first lane (lower == b0); NaN rows
    # fail every compare -> empty one-hot -> their loss is zeroed below.
    in_bucket = (lower < y) & (y <= upper)                 # (TN, B) bool
    onehot = in_bucket | ((y == b0) & (lower == b0))       # (TN, B) bool

    # Per-row log-softmax pieces (columns); no full (TN,B) scaled-log-prob temp.
    m = jnp.max(logits, axis=-1, keepdims=True)                       # (TN, 1)
    lse = jnp.log(jnp.sum(jnp.exp(logits - m), axis=-1, keepdims=True))

    # Fused gather of (logit - log bucket_width) at the target bucket.
    g = jnp.sum(jnp.where(onehot, logits - log_w, 0.0), axis=-1, keepdims=True)

    # nll = -((logit - m - lse) - log_w) = m + lse - (logit - log_w)
    nll = (m + lse) - g
    out_ref[...] = jnp.where(nan_mask, 0.0, nll)


def _round_up(x, m):
    return ((x + m - 1) // m) * m


def _choose_row_tile(n_rows, num_bars, logits_itemsize,
                     *, vmem_budget_bytes=8 << 20, max_tn=1024, n_temps=4):
    """Biggest row tile fitting the VMEM budget, capped at max_tn, multiple of 8.

    Accounts for: double-buffered logits tile, double-buffered lane-sparse
    (tn,1) y/out columns (one (8,128) f32 VMEM tile per 8 rows each -> 512 B/row),
    and ~n_temps live (tn, B) f32 in-kernel temporaries (upcast logits, exp,
    bool masks, selects)."""
    io_per_row = 2 * (num_bars * logits_itemsize + 2 * 512)
    tmp_per_row = n_temps * num_bars * 4
    tn = max(8, vmem_budget_bytes // (io_per_row + tmp_per_row))
    tn = min(tn, max_tn, _round_up(n_rows, 8))
    return max(8, (tn // 8) * 8)


def bar_distribution_forward(borders, logits, y, *, vmem_budget_bytes=8 << 20,
                             max_row_tile=1024):
    """Pallas implementation of BarDistribution.forward (negative log density)."""
    borders = borders.astype(jnp.float32)
    B = logits.shape[-1]
    lead_shape = logits.shape[:-1]
    N = 1
    for d in lead_shape:
        N *= d

    # Keep logits / y in their native dtype in HBM (halves DMA for bf16);
    # the kernel upcasts to f32 for the softmax math.
    logits2 = logits.reshape(N, B)
    y2 = y.reshape(N, 1)

    tn = _choose_row_tile(N, B, jnp.dtype(logits2.dtype).itemsize,
                          vmem_budget_bytes=vmem_budget_bytes,
                          max_tn=max_row_tile)

    # Pad rows to a multiple of the row tile (padded rows get NaN targets -> loss 0).
    Np = _round_up(N, tn)
    if Np != N:
        logits2 = jnp.pad(logits2, ((0, Np - N), (0, 0)))
        y2 = jnp.pad(y2, ((0, Np - N), (0, 0)), constant_values=jnp.nan)

    lower = borders[:-1].reshape(1, B)
    upper = borders[1:].reshape(1, B)
    log_w = jnp.log(borders[1:] - borders[:-1]).reshape(1, B)
    scalars = borders[0:1]                       # [borders[0]] in SMEM

    grid = (Np // tn,)
    out = pl.pallas_call(
        _bar_dist_kernel,
        out_shape=jax.ShapeDtypeStruct((Np, 1), jnp.float32),
        grid=grid,
        in_specs=[
            pl.BlockSpec(memory_space=pltpu.MemorySpace.SMEM),   # [borders[0]]
            pl.BlockSpec((1, B), lambda i: (0, 0)),              # lower borders
            pl.BlockSpec((1, B), lambda i: (0, 0)),              # upper borders
            pl.BlockSpec((1, B), lambda i: (0, 0)),              # log bucket widths
            pl.BlockSpec((tn, B), lambda i: (i, 0)),             # logits tile
            pl.BlockSpec((tn, 1), lambda i: (i, 0)),             # y tile
        ],
        out_specs=pl.BlockSpec((tn, 1), lambda i: (i, 0)),
        compiler_params=pltpu.CompilerParams(
            dimension_semantics=("parallel",),          # rows independent
            vmem_limit_bytes=32 * 1024 * 1024,
        ),
    )(scalars, lower, upper, log_w, logits2, y2)

    return out[:N, 0].reshape(lead_shape)


def _reference_forward(borders, logits, y):
    """Pure-JAX reference mirroring the PyTorch module, for verification."""
    borders = borders.astype(jnp.float32)
    B = logits.shape[-1]
    lead_shape = logits.shape[:-1]
    logits2 = logits.reshape(-1, B).astype(jnp.float32)
    y2 = y.reshape(-1).astype(jnp.float32)

    widths = borders[1:] - borders[:-1]
    nan_mask = jnp.isnan(y2)
    y_c = jnp.where(nan_mask, borders[0], y2)

    count = jnp.sum(borders[None, :] < y_c[:, None], axis=-1)
    idx = count - 1
    idx = jnp.where(y_c == borders[0], 0, idx)
    idx = jnp.where(y_c == borders[-1], B - 1, idx)

    logp = jax.nn.log_softmax(logits2, axis=-1) - jnp.log(widths)[None, :]
    nll = -jnp.take_along_axis(logp, idx[:, None], axis=-1)[:, 0]
    nll = jnp.where(nan_mask, 0.0, nll)
    return nll.reshape(lead_shape)


if __name__ == "__main__":
    key = jax.random.PRNGKey(0)
    k_w, k_logits, k_y = jax.random.split(key, 3)

    num_bars = 128
    batch, seq = 2, 8

    # deterministic, non-uniform, sorted borders (num_bars + 1 of them)
    raw_w = jax.random.uniform(k_w, (num_bars,), minval=0.5, maxval=1.5)
    borders = jnp.concatenate(
        [jnp.zeros((1,), jnp.float32), jnp.cumsum(raw_w)]
    ) - 3.0                                                      # shape (129,)

    logits = jax.random.normal(k_logits, (batch, seq, num_bars), dtype=jnp.float32)
    y = jax.random.uniform(
        k_y, (batch, seq), minval=float(borders[0]) + 1e-3,
        maxval=float(borders[-1]) - 1e-3, dtype=jnp.float32,
    )
    # exercise special paths: NaN target, exact min border, exact max border,
    # exact interior border (falls into the bucket to its left)
    y = y.at[0, 0].set(jnp.nan)
    y = y.at[0, 1].set(borders[0])
    y = y.at[0, 2].set(borders[-1])
    y = y.at[0, 3].set(borders[num_bars // 2])

    out = bar_distribution_forward(borders, logits, y)
    out = jax.block_until_ready(out)
    ref = _reference_forward(borders, logits, y)
    assert out.shape == (batch, seq)
    assert jnp.allclose(out, ref, atol=1e-5, rtol=1e-5), (out, ref)

    # bf16-logits path: native-dtype HBM stream, f32 math inside the kernel
    logits_bf16 = logits.astype(jnp.bfloat16)
    out_bf16 = jax.block_until_ready(bar_distribution_forward(borders, logits_bf16, y))
    ref_bf16 = _reference_forward(borders, logits_bf16.astype(jnp.float32), y)
    assert jnp.allclose(out_bf16, ref_bf16, atol=1e-3, rtol=1e-3), (out_bf16, ref_bf16)

    print("KERNEL_OK")
</pallas_src>

<mosaic_0001>
module attributes {stable_mosaic.version = 11 : i64} {
  func.func @_bar_dist_kernel(%arg0: i32, %arg1: memref<1xf32, #tpu.memory_space<smem>>, %arg2: memref<1x128xf32, #tpu.memory_space<vmem>>, %arg3: memref<1x128xf32, #tpu.memory_space<vmem>>, %arg4: memref<1x128xf32, #tpu.memory_space<vmem>>, %arg5: memref<16x128xf32, #tpu.memory_space<vmem>>, %arg6: memref<16x1xf32, #tpu.memory_space<vmem>>, %arg7: memref<16x1xf32, #tpu.memory_space<vmem>>) attributes {dimension_semantics = [#tpu.dimension_semantics<parallel>], iteration_bounds = array<i64: 1>, scalar_prefetch = 0 : i64, scratch_operands = 0 : i64, tpu.core_type = #tpu.core_type<tc>, window_params = [{transform_indices = @transform_0, window_bounds = array<i64: 1>}, {pipeline_mode = #tpu.pipeline_mode<synchronous>, transform_indices = @transform_1, window_bounds = array<i64: 1, 128>}, {pipeline_mode = #tpu.pipeline_mode<synchronous>, transform_indices = @transform_2, window_bounds = array<i64: 1, 128>}, {pipeline_mode = #tpu.pipeline_mode<synchronous>, transform_indices = @transform_3, window_bounds = array<i64: 1, 128>}, {transform_indices = @transform_4, window_bounds = array<i64: 16, 128>}, {transform_indices = @transform_5, window_bounds = array<i64: 16, 1>}, {transform_indices = @transform_6, window_bounds = array<i64: 16, 1>}]} {
    %c0 = arith.constant 0 : index
    %0 = memref.load %arg1[%c0] : memref<1xf32, #tpu.memory_space<smem>>
    %c0_0 = arith.constant 0 : index
    %c0_1 = arith.constant 0 : index
    %1 = vector.load %arg5[%c0_0, %c0_1] : memref<16x128xf32, #tpu.memory_space<vmem>>, vector<16x128xf32>
    %c0_2 = arith.constant 0 : index
    %c0_3 = arith.constant 0 : index
    %2 = vector.load %arg6[%c0_2, %c0_3] : memref<16x1xf32, #tpu.memory_space<vmem>>, vector<16x1xf32>
    %c0_4 = arith.constant 0 : index
    %c0_5 = arith.constant 0 : index
    %3 = vector.load %arg2[%c0_4, %c0_5] : memref<1x128xf32, #tpu.memory_space<vmem>>, vector<1x128xf32>
    %c0_6 = arith.constant 0 : index
    %c0_7 = arith.constant 0 : index
    %4 = vector.load %arg3[%c0_6, %c0_7] : memref<1x128xf32, #tpu.memory_space<vmem>>, vector<1x128xf32>
    %c0_8 = arith.constant 0 : index
    %c0_9 = arith.constant 0 : index
    %5 = vector.load %arg4[%c0_8, %c0_9] : memref<1x128xf32, #tpu.memory_space<vmem>>, vector<1x128xf32>
    %6 = arith.cmpf one, %2, %2 : vector<16x1xf32>
    %7 = vector.broadcast %3 : vector<1x128xf32> to vector<16x128xf32>
    %8 = vector.broadcast %2 : vector<16x1xf32> to vector<16x128xf32>
    %9 = arith.cmpf olt, %7, %8 : vector<16x128xf32>
    %10 = vector.broadcast %2 : vector<16x1xf32> to vector<16x128xf32>
    %11 = vector.broadcast %4 : vector<1x128xf32> to vector<16x128xf32>
    %12 = arith.cmpf ole, %10, %11 : vector<16x128xf32>
    %13 = arith.andi %9, %12 : vector<16x128xi1>
    %14 = vector.broadcast %0 : f32 to vector<16x1xf32>
    %15 = arith.cmpf oeq, %2, %14 : vector<16x1xf32>
    %16 = vector.broadcast %0 : f32 to vector<1x128xf32>
    %17 = arith.cmpf oeq, %3, %16 : vector<1x128xf32>
    %18 = vector.broadcast %15 : vector<16x1xi1> to vector<16x128xi1>
    %19 = vector.broadcast %17 : vector<1x128xi1> to vector<16x128xi1>
    %20 = arith.andi %18, %19 : vector<16x128xi1>
    %21 = arith.ori %13, %20 : vector<16x128xi1>
    %cst = arith.constant dense<0xFF800000> : vector<16xf32>
    %22 = vector.multi_reduction <maximumf>, %1, %cst [1] : vector<16x128xf32> to vector<16xf32>
    %23 = vector.shape_cast %22 : vector<16xf32> to vector<16x1xf32>
    %24 = vector.broadcast %23 : vector<16x1xf32> to vector<16x128xf32>
    %25 = arith.subf %1, %24 : vector<16x128xf32>
    %26 = math.exp %25 : vector<16x128xf32>
    %cst_10 = arith.constant dense<0.000000e+00> : vector<16xf32>
    %27 = vector.multi_reduction <add>, %26, %cst_10 [1] : vector<16x128xf32> to vector<16xf32>
    %28 = vector.shape_cast %27 : vector<16xf32> to vector<16x1xf32>
    %29 = math.log %28 : vector<16x1xf32>
    %30 = vector.broadcast %5 : vector<1x128xf32> to vector<16x128xf32>
    %31 = arith.subf %1, %30 : vector<16x128xf32>
    %cst_11 = arith.constant 0.000000e+00 : f32
    %32 = vector.broadcast %cst_11 : f32 to vector<16x128xf32>
    %33 = arith.select %21, %31, %32 : vector<16x128xi1>, vector<16x128xf32>
    %cst_12 = arith.constant dense<0.000000e+00> : vector<16xf32>
    %34 = vector.multi_reduction <add>, %33, %cst_12 [1] : vector<16x128xf32> to vector<16xf32>
    %35 = vector.shape_cast %34 : vector<16xf32> to vector<16x1xf32>
    %36 = arith.addf %23, %29 : vector<16x1xf32>
    %37 = arith.subf %36, %35 : vector<16x1xf32>
    %cst_13 = arith.constant 0.000000e+00 : f32
    %38 = vector.broadcast %cst_13 : f32 to vector<16x1xf32>
    %39 = arith.select %6, %38, %37 : vector<16x1xi1>, vector<16x1xf32>
    %c0_14 = arith.constant 0 : index
    %c0_15 = arith.constant 0 : index
    %40 = vector.load %arg7[%c0_14, %c0_15] : memref<16x1xf32, #tpu.memory_space<vmem>>, vector<16x1xf32>
    tpu.vector_store %arg7[%c0_14, %c0_15], %39 {strides = array<i32>} : memref<16x1xf32, #tpu.memory_space<vmem>>, vector<16x1xf32>,
    return
  }
  func.func @transform_0(%arg0: i32) -> i32 {
    %c0_i32 = arith.constant 0 : i32
    %c0_i32_0 = arith.constant 0 : i32
    return %c0_i32 : i32
  }
  func.func @transform_1(%arg0: i32) -> (i32, i32) {
    %c0_i32 = arith.constant 0 : i32
    %c0_i32_0 = arith.constant 0 : i32
    %c0_i32_1 = arith.constant 0 : i32
    return %c0_i32, %c0_i32_0 : i32, i32
  }
  func.func @transform_2(%arg0: i32) -> (i32, i32) {
    %c0_i32 = arith.constant 0 : i32
    %c0_i32_0 = arith.constant 0 : i32
    %c0_i32_1 = arith.constant 0 : i32
    return %c0_i32, %c0_i32_0 : i32, i32
  }
  func.func @transform_3(%arg0: i32) -> (i32, i32) {
    %c0_i32 = arith.constant 0 : i32
    %c0_i32_0 = arith.constant 0 : i32
    %c0_i32_1 = arith.constant 0 : i32
    return %c0_i32, %c0_i32_0 : i32, i32
  }
  func.func @transform_4(%arg0: i32) -> (i32, i32) {
    %c0_i32 = arith.constant 0 : i32
    %c0_i32_0 = arith.constant 0 : i32
    return %arg0, %c0_i32 : i32, i32
  }
  func.func @transform_5(%arg0: i32) -> (i32, i32) {
    %c0_i32 = arith.constant 0 : i32
    %c0_i32_0 = arith.constant 0 : i32
    return %arg0, %c0_i32 : i32, i32
  }
  func.func @transform_6(%arg0: i32) -> (i32, i32) {
    %c0_i32 = arith.constant 0 : i32
    %c0_i32_0 = arith.constant 0 : i32
    return %arg0, %c0_i32 : i32, i32
  }
}

</mosaic_0001>

<llo_original>
// kernel: tpu_custom_call.1
$region0: #{tpu_custom_call.1}
  #allocation0 [shape = 'u32[]', space=smem, size = 0x4, offset = 0x4, fixed_abs, tag = 'smem constant byte address 0x4 - core index']
  #allocation1 [shape = 'u32[144,128]{1,0:T(1,128)}', space=vmem, size = 0x12000, scoped, tag = 'internal scratch']
  #allocation2 [shape = 'f32[1]{0:T(128)S(6)}', space=smem, size = 0x200, scoped, tag = 'scoped memory for tpu_custom_call.1']
  %s0 = inlined_call_operand.<no memory space> [shape: f32[1], index: 0, kind: input, shape index: {}]
  %s1 = inlined_call_operand.vmem [shape: f32[1,128], index: 1, kind: input, shape index: {}]
  %s2 = inlined_call_operand.vmem [shape: f32[1,128], index: 2, kind: input, shape index: {}]
  %s3 = inlined_call_operand.vmem [shape: f32[1,128], index: 3, kind: input, shape index: {}]
  %s4 = inlined_call_operand.vmem [shape: f32[16,128], index: 4, kind: input, shape index: {}]
  %s5 = inlined_call_operand.vmem [shape: f32[16,1], index: 5, kind: input, shape index: {}]
  %s6 = inlined_call_operand.vmem [shape: f32[16,1], index: 6, kind: output, shape index: {}]
  %s7 = sld [smem:[#allocation0]]
  $region34: #{tpu_custom_call.1} parent=0
    _
  %s9 = ssub.s32 1, %s7
  %s10 = scalar_select 0, %s9, %s7
  %11 = sst [smem:[#allocation2]] %s0
  // Predicated region
  $region2: #{tpu_custom_call.1} parent=0 // pred_check
    _
  $region3: #{tpu_custom_call.1} parent=0 // pred_check_branch
    %13 = sbr.rel (0) target = $region5
  $region4: #{tpu_custom_call.1} parent=0 // pred_region
    _
  $region5: #{tpu_custom_call.1} parent=0 // pred_fallthru
    _
  // Predicated region
  $region6: #{tpu_custom_call.1} parent=0 // pred_check
    _
  $region7: #{tpu_custom_call.1} parent=0 // pred_check_branch
    %15 = sbr.rel (0) target = $region9
  $region8: #{tpu_custom_call.1} parent=0 // pred_region
    _
  $region9: #{tpu_custom_call.1} parent=0 // pred_fallthru
    _
  // Predicated region
  $region10: #{tpu_custom_call.1} parent=0 // pred_check
    _
  $region11: #{tpu_custom_call.1} parent=0 // pred_check_branch
    %17 = sbr.rel (0) target = $region13
  $region12: #{tpu_custom_call.1} parent=0 // pred_region
    _
  $region13: #{tpu_custom_call.1} parent=0 // pred_fallthru
    _
  // Predicated region
  $region14: #{tpu_custom_call.1} parent=0 // pred_check
    _
  $region15: #{tpu_custom_call.1} parent=0 // pred_check_branch
    %19 = sbr.rel (0) target = $region17
  $region16: #{tpu_custom_call.1} parent=0 // pred_region
    _
  $region17: #{tpu_custom_call.1} parent=0 // pred_fallthru
    _
  // Predicated region
  $region18: #{tpu_custom_call.1} parent=0 // pred_check
    _
  $region19: #{tpu_custom_call.1} parent=0 // pred_check_branch
    %21 = sbr.rel (0) target = $region21
  $region20: #{tpu_custom_call.1} parent=0 // pred_region
    _
  $region21: #{tpu_custom_call.1} parent=0 // pred_fallthru
    _
  // Predicated region
  $region22: #{tpu_custom_call.1} parent=0 // pred_check
    _
  $region23: #{tpu_custom_call.1} parent=0 // pred_check_branch
    %23 = sbr.rel (0) target = $region25
  $region24: #{tpu_custom_call.1} parent=0 // pred_region
    _
  $region25: #{tpu_custom_call.1} parent=0 // pred_fallthru
    _
  %s24 = sld [smem:[#allocation2]]
  %v25 = vld [vmem:[%s4] sm:$0xff]
  %v26 = vld [vmem:[%s4 + $0x8] sm:$0xff]
  %v27 = vld [vmem:[%s5] sm:$0xff]
  %v28 = vld [vmem:[%s5 + $0x8] sm:$0xff]
  %v29 = vld [vmem:[%s1] sm:$0x1]
  %v30 = vld [vmem:[%s2] sm:$0x1]
  %v31 = vld [vmem:[%s3] sm:$0x1]
  %vm32 = vcmp.ne.f32.partialorder %v27, %v27
  %vm33 = vcmp.ne.f32.partialorder %v28, %v28
  %v35 = vlaneseq
  %v36 = vshrl.u32 %v35, 7
  %v37 = vsub.s32 0, %v36
  %v38 = vrot.slane %v29, %v37
  %41 = vset.pattern.permute.xlu0 0
  %42 = vperm.xlu0 %41, %v27
  %v43 = vpop.permute.xlu0 %42
  %46 = vset.pattern.permute.xlu0 0
  %47 = vperm.xlu0 %46, %v28
  %v48 = vpop.permute.xlu0 %47
  %vm50 = vcmp.lt.f32.partialorder %v38, %v43
  %vm51 = vcmp.lt.f32.partialorder %v38, %v48
  %v53 = vlaneseq
  %v54 = vshrl.u32 %v53, 7
  %v55 = vsub.s32 0, %v54
  %v56 = vrot.slane %v30, %v55
  %vm58 = vcmp.le.f32.partialorder %v43, %v56
  %vm59 = vcmp.le.f32.partialorder %v48, %v56
  %vm60 = vmand %vm50, %vm58
  %vm61 = vmand %vm51, %vm59
  %v62 = vstv %s24
  %vm63 = vcmp.eq.f32.partialorder %v27, %v62
  %vm64 = vcmp.eq.f32.partialorder %v28, %v62
  %vm65 = vcmp.eq.f32.partialorder %v29, %v62
  %v66 = vsel %vm63, 1, 0
  %v67 = vsel %vm64, 1, 0
  %68 = vset.pattern.permute.xlu0 0
  %69 = vperm.xlu0 %68, %v66
  %v70 = vpop.permute.xlu0 %69
  %71 = vset.pattern.permute.xlu0 0
  %72 = vperm.xlu0 %71, %v67
  %v73 = vpop.permute.xlu0 %72
  %vm74 = vcmp.eq.s32.totalorder %v70, 1
  %vm75 = vcmp.eq.s32.totalorder %v73, 1
  %v76 = vsel %vm65, 1, 0
  %v77 = vlaneseq
  %v78 = vshrl.u32 %v77, 7
  %v79 = vsub.s32 0, %v78
  %v80 = vrot.slane %v76, %v79
  %vm81 = vcmp.eq.s32.totalorder %v80, 1
  %vm82 = vmand %vm74, %vm81
  %vm83 = vmand %vm75, %vm81
  %vm84 = vmor %vm60, %vm82
  %vm85 = vmor %vm61, %vm83
  %86 = vmax.xlane.f32.xlu0 %v25
  %v87 = vpop.xlane.xlu0 %86
  %88 = vmax.xlane.f32.xlu0 %v26
  %v89 = vpop.xlane.xlu0 %88
  %v90 = vsub.f32 %v25, %v87
  %v91 = vsub.f32 %v26, %v89
  %v92 = vmul.f32 %v90, 1.442695
  %v93 = vpow.pop %v92
  %v94 = vmul.f32 %v91, 1.442695
  %v95 = vpow.pop %v94
  %96 = vadd.xlane.f32.xlu0 %v93
  %v97 = vpop.xlane.xlu0 %96
  %98 = vadd.xlane.f32.xlu0 %v95
  %v99 = vpop.xlane.xlu0 %98
  %v100 = vlog2.pop %v97
  %v101 = vmul.f32 %v100, 0.6931472
  %v102 = vlog2.pop %v99
  %v103 = vmul.f32 %v102, 0.6931472
  %v105 = vlaneseq
  %v106 = vshrl.u32 %v105, 7
  %v107 = vsub.s32 0, %v106
  %v108 = vrot.slane %v31, %v107
  %v110 = vsub.f32 %v25, %v108
  %v111 = vsub.f32 %v26, %v108
  %v112 = vsel %vm84, %v110, 0.0
  %v113 = vsel %vm85, %v111, 0.0
  %114 = vadd.xlane.f32.xlu0 %v112
  %v115 = vpop.xlane.xlu0 %114
  %116 = vadd.xlane.f32.xlu0 %v113
  %v117 = vpop.xlane.xlu0 %116
  %v118 = vadd.f32 %v87, %v101
  %v119 = vadd.f32 %v89, %v103
  %v120 = vsub.f32 %v118, %v115
  %v121 = vsub.f32 %v119, %v117
  %v122 = vsel %vm32, 0.0, %v120
  %v123 = vsel %vm33, 0.0, %v121
  %vm124 = vcmask 7168
  %125 = vst.msk [vmem:[%s6] sm:$0xff] %vm124, %v122
  %126 = vst.msk [vmem:[%s6 + $0x8] sm:$0xff] %vm124, %v123
  // Predicated region
  $region26: #{tpu_custom_call.1} parent=0 // pred_check
    _
  $region27: #{tpu_custom_call.1} parent=0 // pred_check_branch
    %128 = sbr.rel (0) target = $region29
  $region28: #{tpu_custom_call.1} parent=0 // pred_region
    _
  $region29: #{tpu_custom_call.1} parent=0 // pred_fallthru
    _
  // Predicated region
  $region30: #{tpu_custom_call.1} parent=0 // pred_check
    _
  $region31: #{tpu_custom_call.1} parent=0 // pred_check_branch
    %130 = sbr.rel (0) target = $region33
  $region32: #{tpu_custom_call.1} parent=0 // pred_region
    _
  $region33: #{tpu_custom_call.1} parent=0 // pred_fallthru
    _

</llo_original>
